<compile_context>
chip_gen: v7x
topology: tpu7x:2x2x1
jax: 0.10.0
libtpu: 0.0.40
codegen_flags: <defaults>
</compile_context>

<pallas_src>
import jax
import jax.numpy as jnp
from jax.experimental import pallas as pl
from jax.experimental.pallas import tpu as pltpu

HIDDEN = 768      # FinBERT hidden size (fixed by nn.Linear(768, 64))
OUT = 64          # projection output width
OUT_PAD = 128     # lane-dense padded projection width (sliced back to 64)


def _pool_then_project_kernel(inv_s):
    """Mean-pool (sublane reduce, f32 accumulate) + one projection per batch tile."""

    def kernel(x_ref, w_ref, b_ref, o_ref, acc_ref):
        # x_ref:   [TB, TS, H]    streamed hidden-state block (native dtype)
        # w_ref:   [H, OUT_PAD]   resident projection weight (f32)
        # b_ref:   [1, OUT_PAD]   resident projection bias  (f32)
        # o_ref:   [TB, OUT_PAD]  output block (resident across the S axis)
        # acc_ref: [TB, H]        f32 running sum over the sequence axis
        s = pl.program_id(1)

        @pl.when(s == 0)
        def _():
            acc_ref[...] = jnp.zeros_like(acc_ref)

        # f32 accumulation WITHOUT first materializing an f32 copy of the
        # whole block (the accumulator carries the wide dtype).
        acc_ref[...] += jnp.sum(x_ref[...], axis=1, dtype=jnp.float32)

        @pl.when(s == pl.num_programs(1) - 1)
        def _():
            pooled = acc_ref[...] * inv_s                       # mean over real S
            o_ref[...] = (
                jnp.dot(pooled, w_ref[...], preferred_element_type=jnp.float32)
                + b_ref[...]
            )

    return kernel


def _project_then_pool_kernel(inv_s, tb, ts):
    """MXU path: project every block with W, accumulate projected partial sums."""

    def kernel(x_ref, w_ref, b_ref, o_ref, acc_ref):
        # acc_ref: [TB, OUT_PAD] f32 -- 6x smaller scratch than the pool path.
        s = pl.program_id(1)

        @pl.when(s == 0)
        def _():
            acc_ref[...] = jnp.zeros_like(acc_ref)

        x = x_ref[...].reshape(tb * ts, HIDDEN)
        part = jnp.dot(x, w_ref[...], preferred_element_type=jnp.float32)
        acc_ref[...] += jnp.sum(part.reshape(tb, ts, OUT_PAD), axis=1)

        @pl.when(s == pl.num_programs(1) - 1)
        def _():
            o_ref[...] = acc_ref[...] * inv_s + b_ref[...]

    return kernel


def finbert_head(hidden_states, w, b, *, tb=16, block_bytes=6 * 1024 * 1024,
                 mxu_pooling=None, vmem_limit_bytes=None):
    """hidden_states: [B, S, H]; w: [H, OUT]; b: [OUT]  ->  [B, OUT] f32.

    tb:          max batch-tile size (multiple of 8; clamped to B for small B).
    block_bytes: per-block input byte budget; the sequence tile TS is derived
                 from it so f32 and bf16 inputs use the same VMEM.  6 MiB is
                 safe on v5e's scoped default; ~12 MiB is better on v6e/v7x.
    mxu_pooling: None = auto (True for sub-f32 inputs), True = project-then-
                 pool on the MXU (recommended on v7x), False = VALU pooling.
    """
    B, S, H = hidden_states.shape
    assert H == HIDDEN, H
    assert w.shape == (HIDDEN, OUT) and b.shape == (OUT,)

    if mxu_pooling is None:
        mxu_pooling = hidden_states.dtype != jnp.float32

    x = hidden_states                       # stream native dtype, no cast pass
    esize = x.dtype.itemsize

    # --- tile sizes ---------------------------------------------------------
    TB = B if B <= tb else tb               # B <= tb -> full-dim tile (no pad)
    ts_budget = max(8, block_bytes // (TB * H * esize))
    if ts_budget >= S:
        TS = S
    else:
        TS = max(8, (ts_budget // 8) * 8)   # keep sublane-aligned

    B_pad = pl.cdiv(B, TB) * TB
    S_pad = pl.cdiv(S, TS) * TS
    if (B_pad, S_pad) != (B, S):
        # TODO(synk): replace this pad pass with in-kernel masking of the
        # ragged last S block; for divisible shapes (the common case) no pad
        # is emitted and no extra HBM traffic occurs.
        x = jnp.pad(x, ((0, B_pad - B), (0, S_pad - S), (0, 0)))

    n_b = B_pad // TB
    n_s = S_pad // TS
    inv_s = 1.0 / float(S)

    # --- params: lane-pad 64 -> 128 so output stores are lane-dense ----------
    w_dtype = x.dtype if mxu_pooling else jnp.float32
    w_p = jnp.pad(w, ((0, 0), (0, OUT_PAD - OUT))).astype(w_dtype)
    b_p = jnp.pad(b.astype(jnp.float32), (0, OUT_PAD - OUT)).reshape(1, OUT_PAD)

    if mxu_pooling:
        kernel = _project_then_pool_kernel(inv_s, TB, TS)
        scratch = pltpu.VMEM((TB, OUT_PAD), jnp.float32)
        flops = 2 * B_pad * S_pad * H * OUT_PAD + 2 * B_pad * OUT_PAD
    else:
        kernel = _pool_then_project_kernel(inv_s)
        scratch = pltpu.VMEM((TB, HIDDEN), jnp.float32)
        flops = B_pad * S_pad * H + 2 * B_pad * H * OUT_PAD + B_pad * OUT_PAD

    bytes_accessed = (B_pad * S_pad * H * esize
                      + HIDDEN * OUT_PAD * jnp.dtype(w_dtype).itemsize
                      + OUT_PAD * 4
                      + B_pad * OUT_PAD * 4)
    cost = pl.CostEstimate(flops=flops, transcendentals=0,
                           bytes_accessed=bytes_accessed)

    out = pl.pallas_call(
        kernel,
        out_shape=jax.ShapeDtypeStruct((B_pad, OUT_PAD), jnp.float32),
        grid_spec=pltpu.PrefetchScalarGridSpec(
            num_scalar_prefetch=0,
            grid=(n_b, n_s),                               # reduction axis last
            in_specs=[
                # Streamed hidden-state blocks (auto double-buffered DMA).
                pl.BlockSpec((TB, TS, H), lambda i, s: (i, s, 0)),
                # Weight / bias stay resident (constant index_map, no re-DMA).
                pl.BlockSpec((HIDDEN, OUT_PAD), lambda i, s: (0, 0)),
                pl.BlockSpec((1, OUT_PAD), lambda i, s: (0, 0)),
            ],
            # Same output block across S => resident accumulator slot.
            out_specs=pl.BlockSpec((TB, OUT_PAD), lambda i, s: (i, 0)),
            scratch_shapes=[scratch],
        ),
        compiler_params=pltpu.CompilerParams(
            dimension_semantics=("parallel", "arbitrary"),
            vmem_limit_bytes=vmem_limit_bytes,
        ),
        cost_estimate=cost,
    )(x, w_p, b_p)

    return out[:B, :OUT]


def finbert_head_ref(hidden_states, w, b):
    """Pure-JAX reference (mirrors torch: mean(dim=1) then Linear)."""
    pooled = jnp.mean(hidden_states.astype(jnp.float32), axis=1)
    return pooled @ w + b


if __name__ == "__main__":
    key = jax.random.PRNGKey(0)
    k_x, k_w, k_b = jax.random.split(key, 3)

    # Small, module-consistent shapes: batch=2 headlines, seq=8 tokens,
    # hidden=768 (fixed by the nn.Linear(768, 64) in __init__).
    B, S = 2, 8
    hidden_states = jax.random.normal(k_x, (B, S, HIDDEN), dtype=jnp.float32)

    # Deterministic "nn.Linear(768, 64)" parameters.
    bound = 1.0 / (HIDDEN ** 0.5)
    w = jax.random.uniform(k_w, (HIDDEN, OUT), jnp.float32, -bound, bound)
    b = jax.random.uniform(k_b, (OUT,), jnp.float32, -bound, bound)

    ref = finbert_head_ref(hidden_states, w, b)

    # Default path: pool-then-project (f32 streaming, no cast).
    out_pool = jax.block_until_ready(
        finbert_head(hidden_states, w, b, mxu_pooling=False))
    # MXU path: project-then-pool (recommended on v7x / bf16 inputs).
    out_mxu = jax.block_until_ready(
        finbert_head(hidden_states, w, b, mxu_pooling=True))

    assert out_pool.shape == (B, OUT), out_pool.shape
    assert out_mxu.shape == (B, OUT), out_mxu.shape
    assert jnp.allclose(out_pool, ref, atol=2e-2, rtol=2e-2), "pool path mismatch"
    assert jnp.allclose(out_mxu, ref, atol=2e-2, rtol=2e-2), "mxu path mismatch"

    print("KERNEL_OK")
</pallas_src>

<mosaic_0001>
module attributes {stable_mosaic.version = 11 : i64} {
  func.func @kernel(%arg0: i32, %arg1: i32, %arg2: memref<2x8x768xf32, #tpu.memory_space<vmem>>, %arg3: memref<768x128xf32, #tpu.memory_space<vmem>>, %arg4: memref<1x128xf32, #tpu.memory_space<vmem>>, %arg5: memref<2x128xf32, #tpu.memory_space<vmem>>, %arg6: memref<2x768xf32, #tpu.memory_space<vmem>>) attributes {dimension_semantics = [#tpu.dimension_semantics<parallel>, #tpu.dimension_semantics<arbitrary>], iteration_bounds = array<i64: 1, 1>, scalar_prefetch = 0 : i64, scratch_operands = 1 : i64, tpu.core_type = #tpu.core_type<tc>, window_params = [{transform_indices = @transform_0, window_bounds = array<i64: 2, 8, 768>}, {pipeline_mode = #tpu.pipeline_mode<synchronous>, transform_indices = @transform_1, window_bounds = array<i64: 768, 128>}, {pipeline_mode = #tpu.pipeline_mode<synchronous>, transform_indices = @transform_2, window_bounds = array<i64: 1, 128>}, {transform_indices = @transform_3, window_bounds = array<i64: 2, 128>}]} {
    %c0_i32 = arith.constant 0 : i32
    %0 = arith.cmpi eq, %arg1, %c0_i32 : i32
    %1 = arith.extui %0 : i1 to i32
    %c0_i32_0 = arith.constant 0 : i32
    %2 = arith.cmpi ne, %1, %c0_i32_0 : i32
    scf.if %2 {
      %cst_9 = arith.constant 0.000000e+00 : f32
      %11 = vector.broadcast %cst_9 : f32 to vector<2x768xf32>
      %c0_10 = arith.constant 0 : index
      %c0_11 = arith.constant 0 : index
      %12 = vector.load %arg6[%c0_10, %c0_11] : memref<2x768xf32, #tpu.memory_space<vmem>>, vector<2x768xf32>
      tpu.vector_store %arg6[%c0_10, %c0_11], %11 {strides = array<i32>} : memref<2x768xf32, #tpu.memory_space<vmem>>, vector<2x768xf32>,
    } else {
    }
    %c0 = arith.constant 0 : index
    %c0_1 = arith.constant 0 : index
    %3 = vector.load %arg6[%c0, %c0_1] : memref<2x768xf32, #tpu.memory_space<vmem>>, vector<2x768xf32>
    %c0_2 = arith.constant 0 : index
    %c0_3 = arith.constant 0 : index
    %c0_4 = arith.constant 0 : index
    %4 = vector.load %arg2[%c0_2, %c0_3, %c0_4] : memref<2x8x768xf32, #tpu.memory_space<vmem>>, vector<2x8x768xf32>
    %cst = arith.constant dense<0.000000e+00> : vector<2x768xf32>
    %5 = vector.multi_reduction <add>, %4, %cst [1] : vector<2x8x768xf32> to vector<2x768xf32>
    %6 = arith.addf %3, %5 : vector<2x768xf32>
    %c0_5 = arith.constant 0 : index
    %c0_6 = arith.constant 0 : index
    %7 = vector.load %arg6[%c0_5, %c0_6] : memref<2x768xf32, #tpu.memory_space<vmem>>, vector<2x768xf32>
    tpu.vector_store %arg6[%c0_5, %c0_6], %6 {strides = array<i32>} : memref<2x768xf32, #tpu.memory_space<vmem>>, vector<2x768xf32>,
    %c0_i32_7 = arith.constant 0 : i32
    %8 = arith.cmpi eq, %arg1, %c0_i32_7 : i32
    %9 = arith.extui %8 : i1 to i32
    %c0_i32_8 = arith.constant 0 : i32
    %10 = arith.cmpi ne, %9, %c0_i32_8 : i32
    scf.if %10 {
      %c0_9 = arith.constant 0 : index
      %c0_10 = arith.constant 0 : index
      %11 = vector.load %arg6[%c0_9, %c0_10] : memref<2x768xf32, #tpu.memory_space<vmem>>, vector<2x768xf32>
      %cst_11 = arith.constant 1.250000e-01 : f32
      %12 = vector.broadcast %cst_11 : f32 to vector<2x768xf32>
      %13 = arith.mulf %11, %12 : vector<2x768xf32>
      %c0_12 = arith.constant 0 : index
      %c0_13 = arith.constant 0 : index
      %14 = vector.load %arg3[%c0_12, %c0_13] : memref<768x128xf32, #tpu.memory_space<vmem>>, vector<768x128xf32>
      %cst_14 = arith.constant dense<0.000000e+00> : vector<2x128xf32>
      %15 = tpu.matmul %13, %14, %cst_14 {dimension_numbers = #tpu.dot_dimension_numbers<[1], [0], [0], [1], [0, 0, 1, 1], [], []>} : vector<2x768xf32>, vector<768x128xf32>, vector<2x128xf32> -> vector<2x128xf32>
      %c0_15 = arith.constant 0 : index
      %c0_16 = arith.constant 0 : index
      %16 = vector.load %arg4[%c0_15, %c0_16] : memref<1x128xf32, #tpu.memory_space<vmem>>, vector<1x128xf32>
      %17 = vector.broadcast %16 : vector<1x128xf32> to vector<2x128xf32>
      %18 = arith.addf %15, %17 : vector<2x128xf32>
      %c0_17 = arith.constant 0 : index
      %c0_18 = arith.constant 0 : index
      %19 = vector.load %arg5[%c0_17, %c0_18] : memref<2x128xf32, #tpu.memory_space<vmem>>, vector<2x128xf32>
      tpu.vector_store %arg5[%c0_17, %c0_18], %18 {strides = array<i32>} : memref<2x128xf32, #tpu.memory_space<vmem>>, vector<2x128xf32>,
    } else {
    }
    return
  }
  func.func @transform_0(%arg0: i32, %arg1: i32) -> (i32, i32, i32) {
    %c0_i32 = arith.constant 0 : i32
    %c0_i32_0 = arith.constant 0 : i32
    return %arg0, %arg1, %c0_i32 : i32, i32, i32
  }
  func.func @transform_1(%arg0: i32, %arg1: i32) -> (i32, i32) {
    %c0_i32 = arith.constant 0 : i32
    %c0_i32_0 = arith.constant 0 : i32
    %c0_i32_1 = arith.constant 0 : i32
    return %c0_i32, %c0_i32_0 : i32, i32
  }
  func.func @transform_2(%arg0: i32, %arg1: i32) -> (i32, i32) {
    %c0_i32 = arith.constant 0 : i32
    %c0_i32_0 = arith.constant 0 : i32
    %c0_i32_1 = arith.constant 0 : i32
    return %c0_i32, %c0_i32_0 : i32, i32
  }
  func.func @transform_3(%arg0: i32, %arg1: i32) -> (i32, i32) {
    %c0_i32 = arith.constant 0 : i32
    %c0_i32_0 = arith.constant 0 : i32
    return %arg0, %c0_i32 : i32, i32
  }
}

</mosaic_0001>

<llo_original>
// kernel: tpu_custom_call.1
$region0: #{tpu_custom_call.1}
  #allocation0 [shape = 'u32[]', space=smem, size = 0x4, offset = 0x4, fixed_abs, tag = 'smem constant byte address 0x4 - core index']
  #allocation1 [shape = 'u32[144,128]{1,0:T(1,128)}', space=vmem, size = 0x12000, scoped, tag = 'internal scratch']
  #allocation2 [shape = 'f32[2,768]{1,0:T(2,128)}', space=vmem, size = 0x1800, scoped, tag = 'scratch operand']
  %s0 = inlined_call_operand.hbm [shape: f32[2,8,768], index: 0, kind: input, shape index: {}]
  %s1 = inlined_call_operand.hbm [shape: f32[768,128], index: 1, kind: input, shape index: {}]
  %s2 = inlined_call_operand.vmem [shape: f32[1,128], index: 2, kind: input, shape index: {}]
  %s3 = inlined_call_operand.hbm [shape: f32[2,128], index: 3, kind: output, shape index: {}]
  %s4 = sld [smem:[#allocation0]]
  $region38: #{tpu_custom_call.1} parent=0
    _
  %s6 = ssub.s32 1, %s4
  %s7 = scalar_select 0, %s6, %s4
  $region1: #{tpu_custom_call.1} parent=0
    #allocation3 [shape = 'u8[49152]{0}', space=vmem, size = 0xc000, scoped, tag = 'input window, operand 0, single buffered']
    #allocation4 [shape = 's32[1]{0}', space=sflag, size = 0x4, scoped, tag = 'scoped memory for tpu_custom_call.1']
    #allocation5 [shape = 's32[1]{0}', space=sflag, size = 0x4, scoped, tag = 'scoped memory for tpu_custom_call.1']
    #allocation6 [shape = 'u8[393216]{0}', space=vmem, size = 0x60000, scoped, tag = 'input window, operand 1, single buffered']
    #allocation7 [shape = 's32[1]{0}', space=sflag, size = 0x4, scoped, tag = 'scoped memory for tpu_custom_call.1']
    #allocation8 [shape = 'u8[1024]{0}', space=vmem, size = 0x400, scoped, tag = 'output window, operand 0, single buffered']
    %8 = vsyncpa [#allocation4], 0
    %9 = vsyncpa [#allocation7], 0
    %10 = vsyncpa [#allocation5], 0
    // Predicated region
    $region2: #{tpu_custom_call.1} parent=1 // pred_check
      _
    $region3: #{tpu_custom_call.1} parent=1 // pred_check_branch
      %12 = sbr.rel (0) target = $region5
    $region4: #{tpu_custom_call.1} parent=1 // pred_region
      %s14 = ssub.s32 1536, 1536
      %15 = vsyncadd [#allocation4], %s14
      %s16 = sshll.u32 [#allocation3], 4
      %s17 = int_to_ptr.vmem [resolvable:$true] %s16
      %22 = dma.hbm_to_vmem [thread:$0]  %s0, 1536, %s17, [#allocation4], 768, 768, 48
    $region5: #{tpu_custom_call.1} parent=1 // pred_fallthru
      _
    // Predicated region
    $region6: #{tpu_custom_call.1} parent=1 // pred_check
      _
    $region7: #{tpu_custom_call.1} parent=1 // pred_check_branch
      %24 = sbr.rel (0) target = $region9
    $region8: #{tpu_custom_call.1} parent=1 // pred_region
      %s26 = ssub.s32 12288, 12288
      %27 = vsyncadd [#allocation7], %s26
      %s28 = sshll.u32 [#allocation6], 4
      %s29 = int_to_ptr.vmem [resolvable:$true] %s28
      %34 = dma.hbm_to_vmem [thread:$0]  %s1, 12288, %s29, [#allocation7], 128, 128, 8
    $region9: #{tpu_custom_call.1} parent=1 // pred_fallthru
      _
    // Predicated region
    $region10: #{tpu_custom_call.1} parent=1 // pred_check
      _
    $region11: #{tpu_custom_call.1} parent=1 // pred_check_branch
      %36 = sbr.rel (0) target = $region13
    $region12: #{tpu_custom_call.1} parent=1 // pred_region
      _
    $region13: #{tpu_custom_call.1} parent=1 // pred_fallthru
      _
    // Predicated region
    $region14: #{tpu_custom_call.1} parent=1 // pred_check
      _
    $region15: #{tpu_custom_call.1} parent=1 // pred_check_branch
      %38 = sbr.rel (0) target = $region17
    $region16: #{tpu_custom_call.1} parent=1 // pred_region
      %39 = dma.done [#allocation4], 1536
    $region17: #{tpu_custom_call.1} parent=1 // pred_fallthru
      _
    // Predicated region
    $region18: #{tpu_custom_call.1} parent=1 // pred_check
      _
    $region19: #{tpu_custom_call.1} parent=1 // pred_check_branch
      %41 = sbr.rel (0) target = $region21
    $region20: #{tpu_custom_call.1} parent=1 // pred_region
      %42 = dma.done [#allocation7], 12288
    $region21: #{tpu_custom_call.1} parent=1 // pred_fallthru
      _
    %p43 = scmp.eq.s32.totalorder 0, 0
    // Predicated region
    $region22: #{tpu_custom_call.1} parent=1 // pred_check
      %p44 = pneg %p43
    $region23: #{tpu_custom_call.1} parent=1 // pred_check_branch
      %46 = sbr.rel (%p44) target = $region25
    $region24: #{tpu_custom_call.1} parent=1 // pred_region
      %47 = vst [vmem:[#allocation2] sm:$0xff] 0.0
      %48 = vst [vmem:[#allocation2 + $0x8] sm:$0xf] 0.0
    $region25: #{tpu_custom_call.1} parent=1 // pred_fallthru
      _
    %v49 = vld [vmem:[#allocation2] sm:$0xff]
    %v50 = vld [vmem:[#allocation2 + $0x8] sm:$0xf]
    %v51 = vld [vmem:[#allocation3] sm:$0xff]
    %v52 = vld [vmem:[#allocation3 + $0x8] sm:$0xff]
    %v53 = vld [vmem:[#allocation3 + $0x10] sm:$0xff]
    %v54 = vld [vmem:[#allocation3 + $0x18] sm:$0xff]
    %v55 = vld [vmem:[#allocation3 + $0x20] sm:$0xff]
    %v56 = vld [vmem:[#allocation3 + $0x28] sm:$0xff]
    %v57 = vld [vmem:[#allocation3 + $0x30] sm:$0xff]
    %v58 = vld [vmem:[#allocation3 + $0x38] sm:$0xff]
    %v59 = vld [vmem:[#allocation3 + $0x40] sm:$0xff]
    %v60 = vld [vmem:[#allocation3 + $0x48] sm:$0xff]
    %v61 = vld [vmem:[#allocation3 + $0x50] sm:$0xff]
    %v62 = vld [vmem:[#allocation3 + $0x58] sm:$0xff]
    %v63 = vrot.slane %v51, 4
    %v64 = vadd.f32 %v51, %v63
    %v65 = vrot.slane %v64, 2
    %v66 = vadd.f32 %v64, %v65
    %v67 = vrot.slane %v66, 1
    %v68 = vadd.f32 %v66, %v67
    %v69 = vrot.slane %v52, 4
    %v70 = vadd.f32 %v52, %v69
    %v71 = vrot.slane %v70, 2
    %v72 = vadd.f32 %v70, %v71
    %v73 = vrot.slane %v72, 1
    %v74 = vadd.f32 %v72, %v73
    %v75 = vrot.slane %v53, 4
    %v76 = vadd.f32 %v53, %v75
    %v77 = vrot.slane %v76, 2
    %v78 = vadd.f32 %v76, %v77
    %v79 = vrot.slane %v78, 1
    %v80 = vadd.f32 %v78, %v79
    %v81 = vrot.slane %v54, 4
    %v82 = vadd.f32 %v54, %v81
    %v83 = vrot.slane %v82, 2
    %v84 = vadd.f32 %v82, %v83
    %v85 = vrot.slane %v84, 1
    %v86 = vadd.f32 %v84, %v85
    %v87 = vrot.slane %v55, 4
    %v88 = vadd.f32 %v55, %v87
    %v89 = vrot.slane %v88, 2
    %v90 = vadd.f32 %v88, %v89
    %v91 = vrot.slane %v90, 1
    %v92 = vadd.f32 %v90, %v91
    %v93 = vrot.slane %v56, 4
    %v94 = vadd.f32 %v56, %v93
    %v95 = vrot.slane %v94, 2
    %v96 = vadd.f32 %v94, %v95
    %v97 = vrot.slane %v96, 1
    %v98 = vadd.f32 %v96, %v97
    %v99 = vrot.slane %v57, 4
    %v100 = vadd.f32 %v57, %v99
    %v101 = vrot.slane %v100, 2
    %v102 = vadd.f32 %v100, %v101
    %v103 = vrot.slane %v102, 1
    %v104 = vadd.f32 %v102, %v103
    %v105 = vrot.slane %v58, 4
    %v106 = vadd.f32 %v58, %v105
    %v107 = vrot.slane %v106, 2
    %v108 = vadd.f32 %v106, %v107
    %v109 = vrot.slane %v108, 1
    %v110 = vadd.f32 %v108, %v109
    %v111 = vrot.slane %v59, 4
    %v112 = vadd.f32 %v59, %v111
    %v113 = vrot.slane %v112, 2
    %v114 = vadd.f32 %v112, %v113
    %v115 = vrot.slane %v114, 1
    %v116 = vadd.f32 %v114, %v115
    %v117 = vrot.slane %v60, 4
    %v118 = vadd.f32 %v60, %v117
    %v119 = vrot.slane %v118, 2
    %v120 = vadd.f32 %v118, %v119
    %v121 = vrot.slane %v120, 1
    %v122 = vadd.f32 %v120, %v121
    %v123 = vrot.slane %v61, 4
    %v124 = vadd.f32 %v61, %v123
    %v125 = vrot.slane %v124, 2
    %v126 = vadd.f32 %v124, %v125
    %v127 = vrot.slane %v126, 1
    %v128 = vadd.f32 %v126, %v127
    %v129 = vrot.slane %v62, 4
    %v130 = vadd.f32 %v62, %v129
    %v131 = vrot.slane %v130, 2
    %v132 = vadd.f32 %v130, %v131
    %v133 = vrot.slane %v132, 1
    %v134 = vadd.f32 %v132, %v133
    %v147 = vcombine.low %v68, %v74
    %v148 = vcombine.low %v80, %v86
    %v150 = vunpack.c.l.s4 1983009808
    %v151 = vunpack.c.0.s8 %v150
    %v152 = vlaneseq
    %v153 = vshrl.u32 %v152, 7
    %v154 = vsub.s32 %v151, %v153
    %v155 = vrot.slane %v147, %v154
    %v157 = vunpack.c.l.s4 1983009808
    %v158 = vunpack.c.0.s8 %v157
    %v159 = vlaneseq
    %v160 = vshrl.u32 %v159, 7
    %v161 = vsub.s32 %v158, %v160
    %v162 = vrot.slane %v148, %v161
    %v163 = vcombine.low %v155, %v162
    %v164 = vcombine.low %v92, %v98
    %v166 = vunpack.c.l.s4 1983009808
    %v167 = vunpack.c.0.s8 %v166
    %v168 = vlaneseq
    %v169 = vshrl.u32 %v168, 7
    %v170 = vsub.s32 %v167, %v169
    %v171 = vrot.slane %v164, %v170
    %v172 = vcombine.low %v104, %v110
    %v173 = vcombine.low %v116, %v122
    %v175 = vunpack.c.l.s4 1983009808
    %v176 = vunpack.c.0.s8 %v175
    %v177 = vlaneseq
    %v178 = vshrl.u32 %v177, 7
    %v179 = vsub.s32 %v176, %v178
    %v180 = vrot.slane %v172, %v179
    %v182 = vunpack.c.l.s4 1983009808
    %v183 = vunpack.c.0.s8 %v182
    %v184 = vlaneseq
    %v185 = vshrl.u32 %v184, 7
    %v186 = vsub.s32 %v183, %v185
    %v187 = vrot.slane %v173, %v186
    %v188 = vcombine.low %v180, %v187
    %v189 = vcombine.low %v128, %v134
    %v191 = vunpack.c.l.s4 1983009808
    %v192 = vunpack.c.0.s8 %v191
    %v193 = vlaneseq
    %v194 = vshrl.u32 %v193, 7
    %v195 = vsub.s32 %v192, %v194
    %v196 = vrot.slane %v189, %v195
    %vm197 = vcmask 1044484
    %v198 = vsel %vm197, %v163, %v163
    %vm199 = vcmask 1046534
    %v200 = vsel %vm199, %v163, %v198
    %v201 = vrot.slane %v188, 7
    %vm202 = vcmask 1041409
    %v203 = vsel %vm202, %v201, %v200
    %vm204 = vcmask 1043459
    %v205 = vsel %vm204, %v201, %v203
    %vm206 = vcmask 1045509
    %v207 = vsel %vm206, %v201, %v205
    %vm208 = vcmask 1047559
    %v209 = vsel %vm208, %v201, %v207
    %v210 = vsel %vm197, %v171, %v171
    %v211 = vsel %vm199, %v171, %v210
    %v212 = vrot.slane %v196, 7
    %v213 = vsel %vm202, %v212, %v211
    %v214 = vsel %vm204, %v212, %v213
    %v215 = vsel %vm206, %v212, %v214
    %v216 = vsel %vm208, %v212, %v215
    %v219 = vadd.f32 %v49, %v209
    %v220 = vadd.f32 %v50, %v216
    %221 = vst [vmem:[#allocation2] sm:$0xff] %v219
    %222 = vst [vmem:[#allocation2 + $0x8] sm:$0xf] %v220
    // Predicated region
    $region26: #{tpu_custom_call.1} parent=1 // pred_check
      %p223 = pneg %p43
    $region27: #{tpu_custom_call.1} parent=1 // pred_check_branch
      %225 = sbr.rel (%p223) target = $region29
    $region28: #{tpu_custom_call.1} parent=1 // pred_region
      %v226 = vld [vmem:[#allocation2] sm:$0xff]
      %v227 = vld [vmem:[#allocation2 + $0x8] sm:$0xf]
      %v228 = vmul.f32 %v226, 0.125
      %v229 = vmul.f32 %v227, 0.125
      %v230 = vld [vmem:[#allocation6] sm:$0xff]
      %v231 = vld [vmem:[#allocation6 + $0x8] sm:$0xff]
      %v232 = vld [vmem:[#allocation6 + $0x10] sm:$0xff]
      %v233 = vld [vmem:[#allocation6 + $0x18] sm:$0xff]
      %v234 = vld [vmem:[#allocation6 + $0x20] sm:$0xff]
      %v235 = vld [vmem:[#allocation6 + $0x28] sm:$0xff]
      %v236 = vld [vmem:[#allocation6 + $0x30] sm:$0xff]
      %v237 = vld [vmem:[#allocation6 + $0x38] sm:$0xff]
      %v238 = vld [vmem:[#allocation6 + $0x40] sm:$0xff]
      %v239 = vld [vmem:[#allocation6 + $0x48] sm:$0xff]
      %v240 = vld [vmem:[#allocation6 + $0x50] sm:$0xff]
      %v241 = vld [vmem:[#allocation6 + $0x58] sm:$0xff]
      %v242 = vld [vmem:[#allocation6 + $0x60] sm:$0xff]
      %v243 = vld [vmem:[#allocation6 + $0x68] sm:$0xff]
      %v244 = vld [vmem:[#allocation6 + $0x70] sm:$0xff]
      %v245 = vld [vmem:[#allocation6 + $0x78] sm:$0xff]
      %v246 = vld [vmem:[#allocation6 + $0x80] sm:$0xff]
      %v247 = vld [vmem:[#allocation6 + $0x88] sm:$0xff]
      %v248 = vld [vmem:[#allocation6 + $0x90] sm:$0xff]
      %v249 = vld [vmem:[#allocation6 + $0x98] sm:$0xff]
      %v250 = vld [vmem:[#allocation6 + $0xa0] sm:$0xff]
      %v251 = vld [vmem:[#allocation6 + $0xa8] sm:$0xff]
      %v252 = vld [vmem:[#allocation6 + $0xb0] sm:$0xff]
      %v253 = vld [vmem:[#allocation6 + $0xb8] sm:$0xff]
      %v254 = vld [vmem:[#allocation6 + $0xc0] sm:$0xff]
      %v255 = vld [vmem:[#allocation6 + $0xc8] sm:$0xff]
      %v256 = vld [vmem:[#allocation6 + $0xd0] sm:$0xff]
      %v257 = vld [vmem:[#allocation6 + $0xd8] sm:$0xff]
      %v258 = vld [vmem:[#allocation6 + $0xe0] sm:$0xff]
      %v259 = vld [vmem:[#allocation6 + $0xe8] sm:$0xff]
      %v260 = vld [vmem:[#allocation6 + $0xf0] sm:$0xff]
      %v261 = vld [vmem:[#allocation6 + $0xf8] sm:$0xff]
      %v262 = vld [vmem:[#allocation6 + $0x100] sm:$0xff]
      %v263 = vld [vmem:[#allocation6 + $0x108] sm:$0xff]
      %v264 = vld [vmem:[#allocation6 + $0x110] sm:$0xff]
      %v265 = vld [vmem:[#allocation6 + $0x118] sm:$0xff]
      %v266 = vld [vmem:[#allocation6 + $0x120] sm:$0xff]
      %v267 = vld [vmem:[#allocation6 + $0x128] sm:$0xff]
      %v268 = vld [vmem:[#allocation6 + $0x130] sm:$0xff]
      %v269 = vld [vmem:[#allocation6 + $0x138] sm:$0xff]
      %v270 = vld [vmem:[#allocation6 + $0x140] sm:$0xff]
      %v271 = vld [vmem:[#allocation6 + $0x148] sm:$0xff]
      %v272 = vld [vmem:[#allocation6 + $0x150] sm:$0xff]
      %v273 = vld [vmem:[#allocation6 + $0x158] sm:$0xff]
      %v274 = vld [vmem:[#allocation6 + $0x160] sm:$0xff]
      %v275 = vld [vmem:[#allocation6 + $0x168] sm:$0xff]
      %v276 = vld [vmem:[#allocation6 + $0x170] sm:$0xff]
      %v277 = vld [vmem:[#allocation6 + $0x178] sm:$0xff]
      %v278 = vld [vmem:[#allocation6 + $0x180] sm:$0xff]
      %v279 = vld [vmem:[#allocation6 + $0x188] sm:$0xff]
      %v280 = vld [vmem:[#allocation6 + $0x190] sm:$0xff]
      %v281 = vld [vmem:[#allocation6 + $0x198] sm:$0xff]
      %v282 = vld [vmem:[#allocation6 + $0x1a0] sm:$0xff]
      %v283 = vld [vmem:[#allocation6 + $0x1a8] sm:$0xff]
      %v284 = vld [vmem:[#allocation6 + $0x1b0] sm:$0xff]
      %v285 = vld [vmem:[#allocation6 + $0x1b8] sm:$0xff]
      %v286 = vld [vmem:[#allocation6 + $0x1c0] sm:$0xff]
      %v287 = vld [vmem:[#allocation6 + $0x1c8] sm:$0xff]
      %v288 = vld [vmem:[#allocation6 + $0x1d0] sm:$0xff]
      %v289 = vld [vmem:[#allocation6 + $0x1d8] sm:$0xff]
      %v290 = vld [vmem:[#allocation6 + $0x1e0] sm:$0xff]
      %v291 = vld [vmem:[#allocation6 + $0x1e8] sm:$0xff]
      %v292 = vld [vmem:[#allocation6 + $0x1f0] sm:$0xff]
      %v293 = vld [vmem:[#allocation6 + $0x1f8] sm:$0xff]
      %v294 = vld [vmem:[#allocation6 + $0x200] sm:$0xff]
      %v295 = vld [vmem:[#allocation6 + $0x208] sm:$0xff]
      %v296 = vld [vmem:[#allocation6 + $0x210] sm:$0xff]
      %v297 = vld [vmem:[#allocation6 + $0x218] sm:$0xff]
      %v298 = vld [vmem:[#allocation6 + $0x220] sm:$0xff]
      %v299 = vld [vmem:[#allocation6 + $0x228] sm:$0xff]
      %v300 = vld [vmem:[#allocation6 + $0x230] sm:$0xff]
      %v301 = vld [vmem:[#allocation6 + $0x238] sm:$0xff]
      %v302 = vld [vmem:[#allocation6 + $0x240] sm:$0xff]
      %v303 = vld [vmem:[#allocation6 + $0x248] sm:$0xff]
      %v304 = vld [vmem:[#allocation6 + $0x250] sm:$0xff]
      %v305 = vld [vmem:[#allocation6 + $0x258] sm:$0xff]
      %v306 = vld [vmem:[#allocation6 + $0x260] sm:$0xff]
      %v307 = vld [vmem:[#allocation6 + $0x268] sm:$0xff]
      %v308 = vld [vmem:[#allocation6 + $0x270] sm:$0xff]
      %v309 = vld [vmem:[#allocation6 + $0x278] sm:$0xff]
      %v310 = vld [vmem:[#allocation6 + $0x280] sm:$0xff]
      %v311 = vld [vmem:[#allocation6 + $0x288] sm:$0xff]
      %v312 = vld [vmem:[#allocation6 + $0x290] sm:$0xff]
      %v313 = vld [vmem:[#allocation6 + $0x298] sm:$0xff]
      %v314 = vld [vmem:[#allocation6 + $0x2a0] sm:$0xff]
      %v315 = vld [vmem:[#allocation6 + $0x2a8] sm:$0xff]
      %v316 = vld [vmem:[#allocation6 + $0x2b0] sm:$0xff]
      %v317 = vld [vmem:[#allocation6 + $0x2b8] sm:$0xff]
      %v318 = vld [vmem:[#allocation6 + $0x2c0] sm:$0xff]
      %v319 = vld [vmem:[#allocation6 + $0x2c8] sm:$0xff]
      %v320 = vld [vmem:[#allocation6 + $0x2d0] sm:$0xff]
      %v321 = vld [vmem:[#allocation6 + $0x2d8] sm:$0xff]
      %v322 = vld [vmem:[#allocation6 + $0x2e0] sm:$0xff]
      %v323 = vld [vmem:[#allocation6 + $0x2e8] sm:$0xff]
      %v324 = vld [vmem:[#allocation6 + $0x2f0] sm:$0xff]
      %v325 = vld [vmem:[#allocation6 + $0x2f8] sm:$0xff]
      %v326 = vld [vmem:[%s2] sm:$0x1]
      %v328 = vlaneseq
      %v329 = vshrl.u32 %v328, 7
      %v330 = vsub.s32 0, %v329
      %v331 = vrot.slane %v326, %v330
      %v335 = vcombine.high %v228, %v228
      %v337 = vunpack.c.l.s4 1983009808
      %v338 = vunpack.c.0.s8 %v337
      %v339 = vlaneseq
      %v340 = vshrl.u32 %v339, 7
      %v341 = vsub.s32 %v338, %v340
      %v342 = vrot.slane %v228, %v341
      %v344 = vunpack.c.l.s4 1983009808
      %v345 = vunpack.c.0.s8 %v344
      %v346 = vlaneseq
      %v347 = vshrl.u32 %v346, 7
      %v348 = vsub.s32 %v345, %v347
      %v349 = vrot.slane %v335, %v348
      %v350 = vcombine.high %v342, %v342
      %v351 = vcombine.high %v349, %v349
      %v353 = vunpack.c.l.s4 1983009808
      %v354 = vunpack.c.0.s8 %v353
      %v355 = vlaneseq
      %v356 = vshrl.u32 %v355, 7
      %v357 = vsub.s32 %v354, %v356
      %v358 = vrot.slane %v229, %v357
      %v359 = vcombine.high %v358, %v358
      %366 = vmatprep.subr.mxu0 0.0
      %367 = vmatpush1.msra.mxu0 %v230
      %368 = vmatprep.subr.mxu0 0.0
      %369 = vmatpush1.msra.mxu0 %v231
      %370 = vmatprep.subr.mxu0 0.0
      %371 = vmatpush1.msra.mxu0 %v232
      %372 = vmatprep.subr.mxu0 0.0
      %373 = vmatpush1.msra.mxu0 %v233
      %374 = vmatprep.subr.mxu0 0.0
      %375 = vmatpush1.msra.mxu0 %v234
      %376 = vmatprep.subr.mxu0 0.0
      %377 = vmatpush1.msra.mxu0 %v235
      %378 = vmatprep.subr.mxu0 0.0
      %379 = vmatpush1.msra.mxu0 %v236
      %380 = vmatprep.subr.mxu0 0.0
      %381 = vmatpush1.msra.mxu0 %v237
      %382 = vmatprep.subr.mxu0 0.0
      %383 = vmatpush1.msra.mxu0 %v238
      %384 = vmatprep.subr.mxu0 0.0
      %385 = vmatpush1.msra.mxu0 %v239
      %386 = vmatprep.subr.mxu0 0.0
      %387 = vmatpush1.msra.mxu0 %v240
      %388 = vmatprep.subr.mxu0 0.0
      %389 = vmatpush1.msra.mxu0 %v241
      %390 = vmatprep.subr.mxu0 0.0
      %391 = vmatpush1.msra.mxu0 %v242
      %392 = vmatprep.subr.mxu0 0.0
      %393 = vmatpush1.msra.mxu0 %v243
      %394 = vmatprep.subr.mxu0 0.0
      %395 = vmatpush1.msra.mxu0 %v244
      %396 = vmatprep.subr.mxu0 0.0
      %397 = vmatpush1.msra.mxu0 %v245
      %398 = vmatprep.subr.mxu0 0.0
      %399 = vmatpush1.msra.mxu0 %v246
      %400 = vmatprep.subr.mxu0 0.0
      %401 = vmatpush1.msra.mxu0 %v247
      %402 = vmatprep.subr.mxu0 0.0
      %403 = vmatpush1.msra.mxu0 %v248
      %404 = vmatprep.subr.mxu0 0.0
      %405 = vmatpush1.msra.mxu0 %v249
      %406 = vmatprep.subr.mxu0 0.0
      %407 = vmatpush1.msra.mxu0 %v250
      %408 = vmatprep.subr.mxu0 0.0
      %409 = vmatpush1.msra.mxu0 %v251
      %410 = vmatprep.subr.mxu0 0.0
      %411 = vmatpush1.msra.mxu0 %v252
      %412 = vmatprep.subr.mxu0 0.0
      %413 = vmatpush1.msra.mxu0 %v253
      %414 = vmatprep.subr.mxu0 0.0
      %415 = vmatpush1.msra.mxu0 %v254
      %416 = vmatprep.subr.mxu0 0.0
      %417 = vmatpush1.msra.mxu0 %v255
      %418 = vmatprep.subr.mxu0 0.0
      %419 = vmatpush1.msra.mxu0 %v256
      %420 = vmatprep.subr.mxu0 0.0
      %421 = vmatpush1.msra.mxu0 %v257
      %422 = vmatprep.subr.mxu0 0.0
      %423 = vmatpush1.msra.mxu0 %v258
      %424 = vmatprep.subr.mxu0 0.0
      %425 = vmatpush1.msra.mxu0 %v259
      %426 = vmatprep.subr.mxu0 0.0
      %427 = vmatpush1.msra.mxu0 %v260
      %428 = vmatprep.subr.mxu0 0.0
      %429 = vmatpush1.msra.mxu0 %v261
      %430 = vmatprep.mubr.f32.mxu0 %v350
      %431 = vmatmul.mubr.f32.gmra.mrb[0].mxu0 %v342
      %v432 = vpop.f32.mrb[0].mxu0
      %v433 = vadd.f32 %v331, %v432
      %v434 = vpop.f32.mrb[0].mxu0
      %435 = vdwg.mxu0
      %436 = vmatprep.subr.mxu0 0.0
      %437 = vmatpush1.msra.mxu0 %v262
      %438 = vmatprep.subr.mxu0 0.0
      %439 = vmatpush1.msra.mxu0 %v263
      %440 = vmatprep.subr.mxu0 0.0
      %441 = vmatpush1.msra.mxu0 %v264
      %442 = vmatprep.subr.mxu0 0.0
      %443 = vmatpush1.msra.mxu0 %v265
      %444 = vmatprep.subr.mxu0 0.0
      %445 = vmatpush1.msra.mxu0 %v266
      %446 = vmatprep.subr.mxu0 0.0
      %447 = vmatpush1.msra.mxu0 %v267
      %448 = vmatprep.subr.mxu0 0.0
      %449 = vmatpush1.msra.mxu0 %v268
      %450 = vmatprep.subr.mxu0 0.0
      %451 = vmatpush1.msra.mxu0 %v269
      %452 = vmatprep.subr.mxu0 0.0
      %453 = vmatpush1.msra.mxu0 %v270
      %454 = vmatprep.subr.mxu0 0.0
      %455 = vmatpush1.msra.mxu0 %v271
      %456 = vmatprep.subr.mxu0 0.0
      %457 = vmatpush1.msra.mxu0 %v272
      %458 = vmatprep.subr.mxu0 0.0
      %459 = vmatpush1.msra.mxu0 %v273
      %460 = vmatprep.subr.mxu0 0.0
      %461 = vmatpush1.msra.mxu0 %v274
      %462 = vmatprep.subr.mxu0 0.0
      %463 = vmatpush1.msra.mxu0 %v275
      %464 = vmatprep.subr.mxu0 0.0
      %465 = vmatpush1.msra.mxu0 %v276
      %466 = vmatprep.subr.mxu0 0.0
      %467 = vmatpush1.msra.mxu0 %v277
      %468 = vmatprep.subr.mxu0 0.0
      %469 = vmatpush1.msra.mxu0 %v278
      %470 = vmatprep.subr.mxu0 0.0
      %471 = vmatpush1.msra.mxu0 %v279
      %472 = vmatprep.subr.mxu0 0.0
      %473 = vmatpush1.msra.mxu0 %v280
      %474 = vmatprep.subr.mxu0 0.0
      %475 = vmatpush1.msra.mxu0 %v281
      %476 = vmatprep.subr.mxu0 0.0
      %477 = vmatpush1.msra.mxu0 %v282
      %478 = vmatprep.subr.mxu0 0.0
      %479 = vmatpush1.msra.mxu0 %v283
      %480 = vmatprep.subr.mxu0 0.0
      %481 = vmatpush1.msra.mxu0 %v284
      %482 = vmatprep.subr.mxu0 0.0
      %483 = vmatpush1.msra.mxu0 %v285
      %484 = vmatprep.subr.mxu0 0.0
      %485 = vmatpush1.msra.mxu0 %v286
      %486 = vmatprep.subr.mxu0 0.0
      %487 = vmatpush1.msra.mxu0 %v287
      %488 = vmatprep.subr.mxu0 0.0
      %489 = vmatpush1.msra.mxu0 %v288
      %490 = vmatprep.subr.mxu0 0.0
      %491 = vmatpush1.msra.mxu0 %v289
      %492 = vmatprep.subr.mxu0 0.0
      %493 = vmatpush1.msra.mxu0 %v290
      %494 = vmatprep.subr.mxu0 0.0
      %495 = vmatpush1.msra.mxu0 %v291
      %496 = vmatprep.subr.mxu0 0.0
      %497 = vmatpush1.msra.mxu0 %v292
      %498 = vmatprep.subr.mxu0 0.0
      %499 = vmatpush1.msra.mxu0 %v293
      %500 = vmatprep.mubr.f32.mxu0 %v351
      %501 = vmatmul.mubr.f32.gmra.mrb[0].mxu0 %v349
      %v502 = vpop.f32.mrb[0].mxu0
      %v503 = vadd.f32 %v433, %v502
      %v504 = vpop.f32.mrb[0].mxu0
      %505 = vdwg.mxu0
      %506 = vmatprep.subr.mxu0 0.0
      %507 = vmatpush1.msra.mxu0 %v294
      %508 = vmatprep.subr.mxu0 0.0
      %509 = vmatpush1.msra.mxu0 %v295
      %510 = vmatprep.subr.mxu0 0.0
      %511 = vmatpush1.msra.mxu0 %v296
      %512 = vmatprep.subr.mxu0 0.0
      %513 = vmatpush1.msra.mxu0 %v297
      %514 = vmatprep.subr.mxu0 0.0
      %515 = vmatpush1.msra.mxu0 %v298
      %516 = vmatprep.subr.mxu0 0.0
      %517 = vmatpush1.msra.mxu0 %v299
      %518 = vmatprep.subr.mxu0 0.0
      %519 = vmatpush1.msra.mxu0 %v300
      %520 = vmatprep.subr.mxu0 0.0
      %521 = vmatpush1.msra.mxu0 %v301
      %522 = vmatprep.subr.mxu0 0.0
      %523 = vmatpush1.msra.mxu0 %v302
      %524 = vmatprep.subr.mxu0 0.0
      %525 = vmatpush1.msra.mxu0 %v303
      %526 = vmatprep.subr.mxu0 0.0
      %527 = vmatpush1.msra.mxu0 %v304
      %528 = vmatprep.subr.mxu0 0.0
      %529 = vmatpush1.msra.mxu0 %v305
      %530 = vmatprep.subr.mxu0 0.0
      %531 = vmatpush1.msra.mxu0 %v306
      %532 = vmatprep.subr.mxu0 0.0
      %533 = vmatpush1.msra.mxu0 %v307
      %534 = vmatprep.subr.mxu0 0.0
      %535 = vmatpush1.msra.mxu0 %v308
      %536 = vmatprep.subr.mxu0 0.0
      %537 = vmatpush1.msra.mxu0 %v309
      %538 = vmatprep.subr.mxu0 0.0
      %539 = vmatpush1.msra.mxu0 %v310
      %540 = vmatprep.subr.mxu0 0.0
      %541 = vmatpush1.msra.mxu0 %v311
      %542 = vmatprep.subr.mxu0 0.0
      %543 = vmatpush1.msra.mxu0 %v312
      %544 = vmatprep.subr.mxu0 0.0
      %545 = vmatpush1.msra.mxu0 %v313
      %546 = vmatprep.subr.mxu0 0.0
      %547 = vmatpush1.msra.mxu0 %v314
      %548 = vmatprep.subr.mxu0 0.0
      %549 = vmatpush1.msra.mxu0 %v315
      %550 = vmatprep.subr.mxu0 0.0
      %551 = vmatpush1.msra.mxu0 %v316
      %552 = vmatprep.subr.mxu0 0.0
      %553 = vmatpush1.msra.mxu0 %v317
      %554 = vmatprep.subr.mxu0 0.0
      %555 = vmatpush1.msra.mxu0 %v318
      %556 = vmatprep.subr.mxu0 0.0
      %557 = vmatpush1.msra.mxu0 %v319
      %558 = vmatprep.subr.mxu0 0.0
      %559 = vmatpush1.msra.mxu0 %v320
      %560 = vmatprep.subr.mxu0 0.0
      %561 = vmatpush1.msra.mxu0 %v321
      %562 = vmatprep.subr.mxu0 0.0
      %563 = vmatpush1.msra.mxu0 %v322
      %564 = vmatprep.subr.mxu0 0.0
      %565 = vmatpush1.msra.mxu0 %v323
      %566 = vmatprep.subr.mxu0 0.0
      %567 = vmatpush1.msra.mxu0 %v324
      %568 = vmatprep.subr.mxu0 0.0
      %569 = vmatpush1.msra.mxu0 %v325
      %570 = vmatprep.mubr.f32.mxu0 %v359
      %571 = vmatmul.mubr.f32.gmra.mrb[0].mxu0 %v358
      %v572 = vpop.f32.mrb[0].mxu0
      %v573 = vadd.f32 %v503, %v572
      %v574 = vpop.f32.mrb[0].mxu0
      %575 = vdwg.mxu0
      %576 = vst [vmem:[#allocation8] sm:$0x3] %v573
    $region29: #{tpu_custom_call.1} parent=1 // pred_fallthru
      _
    // Predicated region
    $region30: #{tpu_custom_call.1} parent=1 // pred_check
      _
    $region31: #{tpu_custom_call.1} parent=1 // pred_check_branch
      %578 = sbr.rel (0) target = $region33
    $region32: #{tpu_custom_call.1} parent=1 // pred_region
      %s580 = ssub.s32 32, 32
      %581 = vsyncadd [#allocation5], %s580
      %s583 = sshll.u32 [#allocation8], 4
      %s584 = int_to_ptr.vmem [resolvable:$true] %s583
      %586 = dma.vmem_to_hbm [thread:$0]  %s584, 32, %s3, [#allocation5]
    $region33: #{tpu_custom_call.1} parent=1 // pred_fallthru
      _
    // Predicated region
    $region34: #{tpu_custom_call.1} parent=1 // pred_check
      _
    $region35: #{tpu_custom_call.1} parent=1 // pred_check_branch
      %588 = sbr.rel (0) target = $region37
    $region36: #{tpu_custom_call.1} parent=1 // pred_region
      %589 = dma.done [#allocation5], 32
    $region37: #{tpu_custom_call.1} parent=1 // pred_fallthru
      _
    %590 = vsyncpa [#allocation4], 1
    %591 = vsyncpa [#allocation7], 1
    %592 = vsyncpa [#allocation5], 1

</llo_original>
